<compile_context>
chip_gen: v6e
topology: v6e:2x2x1
jax: 0.10.0
libtpu: 0.0.40
codegen_flags: <defaults>
</compile_context>

<pallas_src>
import jax
import jax.numpy as jnp
from jax.experimental import pallas as pl
from jax.experimental.pallas import tpu as pltpu

LANE = 128
MAX_BLOCK_BYTES = 4 * 1024 * 1024      # ~4 MiB per block buffer
VMEM_LIMIT_BYTES = 32 * 1024 * 1024    # 2 arrays x 2 buffers x 4 MiB = 16 MiB + headroom


def _copy_kernel(x_ref, o_ref):
    # Pure element copy of the current tile (reshape preserves data order).
    o_ref[...] = x_ref[...]


def _native_sublane(dtype):
    # Native sublane packing: 8 rows for 32-bit, 16 for 16-bit, 32 for 8-bit.
    itemsize = jnp.dtype(dtype).itemsize
    return {4: 8, 2: 16, 1: 32}.get(itemsize, 8)


def _round_up(a, b):
    return -(-a // b) * b


def _copy_call(x2d, block_shape, grid, index_map, dtype, total_bytes, donate):
    kwargs = {"input_output_aliases": {0: 0}} if donate else {}
    return pl.pallas_call(
        _copy_kernel,
        out_shape=jax.ShapeDtypeStruct(x2d.shape, dtype),
        grid_spec=pltpu.PrefetchScalarGridSpec(
            num_scalar_prefetch=0,
            grid=grid,
            in_specs=[pl.BlockSpec(block_shape, index_map)],
            out_specs=pl.BlockSpec(block_shape, index_map),
        ),
        compiler_params=pltpu.CompilerParams(
            dimension_semantics=("parallel",),
            vmem_limit_bytes=VMEM_LIMIT_BYTES,
        ),
        cost_estimate=pl.CostEstimate(
            flops=0, transcendentals=0, bytes_accessed=2 * total_bytes
        ),
        **kwargs,
    )(x2d)


def _pick_block_rows(rows, sub, row_bytes):
    """Fixed ~4 MiB block (multiple of `sub`); ensure >=2 grid steps when possible."""
    cap = max(sub, (MAX_BLOCK_BYTES // row_bytes) // sub * sub)
    block_rows = min(cap, _round_up(rows, sub))
    # Megacore: the single "parallel" axis should have >= 2 steps on v7x.
    if pl.cdiv(rows, block_rows) < 2 and rows >= 2 * sub:
        block_rows = _round_up(pl.cdiv(rows, 2), sub)
    return block_rows


def view_reshape(x, shape, donate=False):
    """Pallas equivalent of View(shape)(x): reshape x to a 1-D array of length `shape`."""
    total = int(shape)
    assert x.size == total, f"cannot reshape array of size {x.size} into ({total},)"

    dtype = x.dtype
    itemsize = jnp.dtype(dtype).itemsize
    sub = _native_sublane(dtype)
    total_bytes = total * itemsize

    # Metadata-only flatten (same row-major order as torch.reshape).
    flat = x.reshape(-1)

    if total % LANE == 0:
        # Lane-aligned path: view the flat buffer as (rows, width) with the
        # widest lane-dense width that divides total and keeps rows >= sub.
        width = LANE
        for cand in (4096, 2048, 1024, 512, 256):
            if total % cand == 0 and total // cand >= sub:
                width = cand
                break
        rows = total // width
        block_rows = _pick_block_rows(rows, sub, width * itemsize)
        grid = (pl.cdiv(rows, block_rows),)     # partial last block is masked
        x2d = flat.reshape(rows, width)
        out2d = _copy_call(
            x2d, (block_rows, width), grid, lambda i: (i, 0),
            dtype, total_bytes, donate,
        )
        return out2d.reshape(total)

    # Unaligned fallback (total not a multiple of 128): tile the (1, total)
    # view along lanes with a cdiv grid so large odd-sized inputs still
    # pipeline and never exceed VMEM.  A 1-row block pads to 8 sublanes in
    # VMEM, so cap the per-block data bytes at MAX_BLOCK_BYTES // 8.
    cap_cols = max(LANE, (MAX_BLOCK_BYTES // 8 // itemsize) // LANE * LANE)
    block_cols = min(cap_cols, _round_up(total, LANE))
    if pl.cdiv(total, block_cols) < 2 and total >= 2 * LANE:
        block_cols = _round_up(pl.cdiv(total, 2), LANE)
    grid = (pl.cdiv(total, block_cols),)
    x2d = flat.reshape(1, total)
    out2d = _copy_call(
        x2d, (1, block_cols), grid, lambda i: (0, i),
        dtype, total_bytes, donate,
    )
    return out2d.reshape(total)


if __name__ == "__main__":
    key = jax.random.PRNGKey(0)

    # Small NCHW input, consistent with a typical conv feature map.
    x = jax.random.normal(key, (2, 4, 16, 16), dtype=jnp.float32)
    target_shape = x.size  # View(2*4*16*16) -> flatten to 1-D

    y = jax.block_until_ready(view_reshape(x, target_shape))
    ref = x.reshape(target_shape)
    assert y.shape == (target_shape,)
    assert y.dtype == x.dtype
    assert jnp.array_equal(y, ref), "Pallas view kernel mismatch (aligned path)"

    # Non-128-aligned fallback path (tiny odd size).
    x2 = jax.random.normal(jax.random.PRNGKey(1), (3, 5, 7), dtype=jnp.float32)
    y2 = jax.block_until_ready(view_reshape(x2, x2.size))
    assert jnp.array_equal(y2, x2.reshape(x2.size)), "Pallas view kernel mismatch (tail path)"

    # Aligned path with a row count that does NOT divide the block: exercises
    # the cdiv grid (2 steps) with a masked partial last block.
    x3 = jax.random.normal(jax.random.PRNGKey(2), (520, 384), dtype=jnp.float32)
    y3 = jax.block_until_ready(view_reshape(x3, x3.size))
    assert jnp.array_equal(y3, x3.reshape(x3.size)), "Pallas view kernel mismatch (cdiv path)"

    # 16-bit dtype (native sublane 16).
    x4 = jax.random.normal(jax.random.PRNGKey(3), (24, 3, 128), dtype=jnp.bfloat16)
    y4 = jax.block_until_ready(view_reshape(x4, x4.size))
    assert jnp.array_equal(y4, x4.reshape(x4.size)), "Pallas view kernel mismatch (bf16 path)"

    print("KERNEL_OK")
</pallas_src>

<mosaic_0001>
module attributes {stable_mosaic.version = 11 : i64} {
  func.func @_copy_kernel(%arg0: i32, %arg1: memref<8x256xf32, #tpu.memory_space<vmem>>, %arg2: memref<8x256xf32, #tpu.memory_space<vmem>>) attributes {dimension_semantics = [#tpu.dimension_semantics<parallel>], iteration_bounds = array<i64: 1>, scalar_prefetch = 0 : i64, scratch_operands = 0 : i64, tpu.core_type = #tpu.core_type<tc>, window_params = [{transform_indices = @transform_0, window_bounds = array<i64: 8, 256>}, {transform_indices = @transform_1, window_bounds = array<i64: 8, 256>}]} {
    %c0 = arith.constant 0 : index
    %c0_0 = arith.constant 0 : index
    %0 = vector.load %arg1[%c0, %c0_0] : memref<8x256xf32, #tpu.memory_space<vmem>>, vector<8x256xf32>
    %c0_1 = arith.constant 0 : index
    %c0_2 = arith.constant 0 : index
    %1 = vector.load %arg2[%c0_1, %c0_2] : memref<8x256xf32, #tpu.memory_space<vmem>>, vector<8x256xf32>
    tpu.vector_store %arg2[%c0_1, %c0_2], %0 {strides = array<i32>} : memref<8x256xf32, #tpu.memory_space<vmem>>, vector<8x256xf32>,
    return
  }
  func.func @transform_0(%arg0: i32) -> (i32, i32) {
    %c0_i32 = arith.constant 0 : i32
    %c0_i32_0 = arith.constant 0 : i32
    return %arg0, %c0_i32 : i32, i32
  }
  func.func @transform_1(%arg0: i32) -> (i32, i32) {
    %c0_i32 = arith.constant 0 : i32
    %c0_i32_0 = arith.constant 0 : i32
    return %arg0, %c0_i32 : i32, i32
  }
}

</mosaic_0001>

<llo_original>
// kernel: tpu_custom_call.1
$region0: #{tpu_custom_call.1}
  #allocation0 [shape = 'u32[]', space=smem, size = 0x4, offset = 0x4, fixed_abs, tag = 'smem constant byte address 0x4 - core index']
  #allocation1 [shape = 'u32[144,128]{1,0:T(1,128)}', space=vmem, size = 0x12000, scoped, tag = 'internal scratch']
  %s0 = inlined_call_operand.hbm [shape: f32[8,256], index: 0, kind: input, shape index: {}]
  %s1 = inlined_call_operand.hbm [shape: f32[8,256], index: 1, kind: output, shape index: {}]
  %s2 = sld [smem:[#allocation0]]
  $region18: #{tpu_custom_call.1} parent=0
    _
  %s4 = ssub.s32 1, %s2
  %s5 = scalar_select 0, %s4, %s2
  $region1: #{tpu_custom_call.1} parent=0
    #allocation2 [shape = 'u8[8192]{0}', space=vmem, size = 0x2000, scoped, tag = 'input window, operand 0, single buffered']
    #allocation3 [shape = 's32[1]{0}', space=sflag, size = 0x4, scoped, tag = 'scoped memory for tpu_custom_call.1']
    #allocation4 [shape = 's32[1]{0}', space=sflag, size = 0x4, scoped, tag = 'scoped memory for tpu_custom_call.1']
    #allocation5 [shape = 'u8[8192]{0}', space=vmem, size = 0x2000, scoped, tag = 'output window, operand 0, single buffered']
    %6 = vsyncpa [#allocation3], 0
    %7 = vsyncpa [#allocation4], 0
    // Predicated region
    $region2: #{tpu_custom_call.1} parent=1 // pred_check
      _
    $region3: #{tpu_custom_call.1} parent=1 // pred_check_branch
      %9 = sbr.rel (0) target = $region5
    $region4: #{tpu_custom_call.1} parent=1 // pred_region
      %s11 = ssub.s32 256, 256
      %12 = vsyncadd [#allocation3], %s11
      %s14 = sshll.u32 [#allocation2], 4
      %s15 = int_to_ptr.vmem [resolvable:$true] %s14
      %17 = dma.hbm_to_vmem [thread:$0]  %s0, 256, %s15, [#allocation3]
    $region5: #{tpu_custom_call.1} parent=1 // pred_fallthru
      _
    // Predicated region
    $region6: #{tpu_custom_call.1} parent=1 // pred_check
      _
    $region7: #{tpu_custom_call.1} parent=1 // pred_check_branch
      %19 = sbr.rel (0) target = $region9
    $region8: #{tpu_custom_call.1} parent=1 // pred_region
      %20 = dma.done [#allocation3], 256
    $region9: #{tpu_custom_call.1} parent=1 // pred_fallthru
      _
    %v21 = vld [vmem:[#allocation2] sm:$0xff]
    %v22 = vld [vmem:[#allocation2 + $0x8] sm:$0xff]
    %23 = vst [vmem:[#allocation5] sm:$0xff] %v21
    %24 = vst [vmem:[#allocation5 + $0x8] sm:$0xff] %v22
    // Predicated region
    $region10: #{tpu_custom_call.1} parent=1 // pred_check
      _
    $region11: #{tpu_custom_call.1} parent=1 // pred_check_branch
      %26 = sbr.rel (0) target = $region13
    $region12: #{tpu_custom_call.1} parent=1 // pred_region
      %s28 = ssub.s32 256, 256
      %29 = vsyncadd [#allocation4], %s28
      %s31 = sshll.u32 [#allocation5], 4
      %s32 = int_to_ptr.vmem [resolvable:$true] %s31
      %34 = dma.vmem_to_hbm [thread:$0]  %s32, 256, %s1, [#allocation4]
    $region13: #{tpu_custom_call.1} parent=1 // pred_fallthru
      _
    // Predicated region
    $region14: #{tpu_custom_call.1} parent=1 // pred_check
      _
    $region15: #{tpu_custom_call.1} parent=1 // pred_check_branch
      %36 = sbr.rel (0) target = $region17
    $region16: #{tpu_custom_call.1} parent=1 // pred_region
      %37 = dma.done [#allocation4], 256
    $region17: #{tpu_custom_call.1} parent=1 // pred_fallthru
      _
    %38 = vsyncpa [#allocation3], 1
    %39 = vsyncpa [#allocation4], 1

</llo_original>
